<compile_context>
chip_gen: v7x
topology: tpu7x:2x2x1
jax: 0.10.0
libtpu: 0.0.40
codegen_flags: <defaults>
</compile_context>

<pallas_src>
import jax
import jax.numpy as jnp
from jax.experimental import pallas as pl
from jax.experimental.pallas import tpu as pltpu


# ----------------------------------------------------------------------------
# Fused Pallas kernel: state_embedding (stand-in) + Actor head in one body.
# TODO(synk): the real state_embedding architecture is defined elsewhere; a
#             deterministic linear+tanh embedding is used as a stand-in.
# ----------------------------------------------------------------------------
def _fused_actor_kernel(x_ref, we_ref, be_ref, wo_ref, bo_ref, out_ref):
    # layer 1: s_z = tanh(x @ W_e + b_e)   -- intermediate stays in VMEM/vregs
    s_z = jnp.tanh(
        jnp.dot(x_ref[...], we_ref[...], preferred_element_type=jnp.float32)
        + be_ref[...]
    )
    # layer 2 (Actor head): action = tanh(s_z @ W_o + b_o)
    z = jnp.dot(s_z, wo_ref[...], preferred_element_type=jnp.float32) + bo_ref[...]
    out_ref[...] = jnp.tanh(z).astype(out_ref.dtype)


def actor_forward(params, x, *, block_b: int = 256):
    """action = tanh(w_out(tanh(x @ W_e + b_e))) in a single fused Pallas kernel."""
    we, be = params["emb_w_t"], params["emb_b"]
    wo, bo = params["w_out_t"], params["b_out"]
    B, d_in = x.shape
    ls = we.shape[1]
    action_dim = wo.shape[1]
    assert we.shape == (d_in, ls) and be.shape == (1, ls)
    assert wo.shape == (ls, action_dim) and bo.shape == (1, action_dim)

    if B <= block_b:
        # Tiny batch (e.g. action selection): single invocation, no grid,
        # everything resident in VMEM. No pipeline step, no extra launch.
        vmem = pl.BlockSpec(memory_space=pltpu.MemorySpace.VMEM)
        return pl.pallas_call(
            _fused_actor_kernel,
            out_shape=jax.ShapeDtypeStruct((B, action_dim), jnp.float32),
            in_specs=[vmem, vmem, vmem, vmem, vmem],
            out_specs=vmem,
        )(x, we, be, wo, bo)

    # Training-sized batch: tile the batch dimension. Weights/bias blocks map to
    # block index (0, 0) on every grid step, so they stay VMEM-resident while
    # activation tiles stream through the auto-pipeline.
    n_blocks = pl.cdiv(B, block_b)
    bp = n_blocks * block_b
    x_p = jnp.pad(x, ((0, bp - B), (0, 0))) if bp != B else x

    out = pl.pallas_call(
        _fused_actor_kernel,
        out_shape=jax.ShapeDtypeStruct((bp, action_dim), jnp.float32),
        grid=(n_blocks,),
        in_specs=[
            pl.BlockSpec((block_b, d_in), lambda i: (i, 0)),
            pl.BlockSpec((d_in, ls), lambda i: (0, 0)),
            pl.BlockSpec((1, ls), lambda i: (0, 0)),
            pl.BlockSpec((ls, action_dim), lambda i: (0, 0)),
            pl.BlockSpec((1, action_dim), lambda i: (0, 0)),
        ],
        out_specs=pl.BlockSpec((block_b, action_dim), lambda i: (i, 0)),
        compiler_params=pltpu.CompilerParams(
            dimension_semantics=("parallel",)  # megacore sharding on v7x
        ),
    )(x_p, we, be, wo, bo)
    return out[:B]


# ----------------------------------------------------------------------------
# "Module" parameters: deterministic init matching nn.Linear default
# U(-1/sqrt(fan_in), 1/sqrt(fan_in)); `init=True` scales w_out params by 0.1
# like the PyTorch Actor.
# ----------------------------------------------------------------------------
def init_actor_params(key, state_dim, ls, action_dim, init=False):
    k1, k2, k3, k4 = jax.random.split(key, 4)
    bnd_e = 1.0 / jnp.sqrt(state_dim)
    emb_w_t = jax.random.uniform(k1, (state_dim, ls), jnp.float32, -bnd_e, bnd_e)
    emb_b = jax.random.uniform(k2, (1, ls), jnp.float32, -bnd_e, bnd_e)
    bnd_o = 1.0 / jnp.sqrt(ls)
    w_out_t = jax.random.uniform(k3, (ls, action_dim), jnp.float32, -bnd_o, bnd_o)
    b_out = jax.random.uniform(k4, (1, action_dim), jnp.float32, -bnd_o, bnd_o)
    if init:
        w_out_t = w_out_t * 0.1
        b_out = b_out * 0.1
    return dict(emb_w_t=emb_w_t, emb_b=emb_b, w_out_t=w_out_t, b_out=b_out)


if __name__ == "__main__":
    state_dim = 16   # input feature dim
    ls = 32          # args.ls
    action_dim = 8   # args.action_dim

    key = jax.random.PRNGKey(0)
    kp, kx1, kx2 = jax.random.split(key, 3)
    params = init_actor_params(kp, state_dim, ls, action_dim, init=False)

    def ref_forward(p, x):
        s_z = jnp.tanh(x @ p["emb_w_t"] + p["emb_b"])
        return jnp.tanh(s_z @ p["w_out_t"] + p["b_out"])

    # ---- small-batch path (no grid, fully fused, all-VMEM) ----
    x_small = jax.random.normal(kx1, (2, state_dim), dtype=jnp.float32)
    a_small = jax.block_until_ready(actor_forward(params, x_small))
    assert a_small.shape == (2, action_dim)
    assert jnp.allclose(a_small, ref_forward(params, x_small), atol=1e-4), \
        "small-batch mismatch vs reference"

    # ---- batch-tiled path (grid over batch, resident weights, padding) ----
    x_large = jax.random.normal(kx2, (1000, state_dim), dtype=jnp.float32)
    a_large = jax.block_until_ready(actor_forward(params, x_large, block_b=256))
    assert a_large.shape == (1000, action_dim)
    assert jnp.allclose(a_large, ref_forward(params, x_large), atol=1e-4), \
        "large-batch mismatch vs reference"

    print("KERNEL_OK")
</pallas_src>

<mosaic_0001>
module attributes {stable_mosaic.version = 11 : i64} {
  func.func @_fused_actor_kernel(%arg0: memref<2x16xf32, #tpu.memory_space<vmem>>, %arg1: memref<16x32xf32, #tpu.memory_space<vmem>>, %arg2: memref<1x32xf32, #tpu.memory_space<vmem>>, %arg3: memref<32x8xf32, #tpu.memory_space<vmem>>, %arg4: memref<1x8xf32, #tpu.memory_space<vmem>>, %arg5: memref<2x8xf32, #tpu.memory_space<vmem>>) attributes {dimension_semantics = [], scalar_prefetch = 0 : i64, scratch_operands = 0 : i64, tpu.core_type = #tpu.core_type<tc>} {
    %c0 = arith.constant 0 : index
    %c0_0 = arith.constant 0 : index
    %0 = vector.load %arg0[%c0, %c0_0] : memref<2x16xf32, #tpu.memory_space<vmem>>, vector<2x16xf32>
    %c0_1 = arith.constant 0 : index
    %c0_2 = arith.constant 0 : index
    %1 = vector.load %arg1[%c0_1, %c0_2] : memref<16x32xf32, #tpu.memory_space<vmem>>, vector<16x32xf32>
    %cst = arith.constant dense<0.000000e+00> : vector<2x32xf32>
    %2 = tpu.matmul %0, %1, %cst {dimension_numbers = #tpu.dot_dimension_numbers<[1], [0], [0], [1], [0, 0, 1, 1], [], []>} : vector<2x16xf32>, vector<16x32xf32>, vector<2x32xf32> -> vector<2x32xf32>
    %c0_3 = arith.constant 0 : index
    %c0_4 = arith.constant 0 : index
    %3 = vector.load %arg2[%c0_3, %c0_4] : memref<1x32xf32, #tpu.memory_space<vmem>>, vector<1x32xf32>
    %4 = vector.broadcast %3 : vector<1x32xf32> to vector<2x32xf32>
    %5 = arith.addf %2, %4 : vector<2x32xf32>
    %6 = math.tanh %5 : vector<2x32xf32>
    %c0_5 = arith.constant 0 : index
    %c0_6 = arith.constant 0 : index
    %7 = vector.load %arg3[%c0_5, %c0_6] : memref<32x8xf32, #tpu.memory_space<vmem>>, vector<32x8xf32>
    %cst_7 = arith.constant dense<0.000000e+00> : vector<2x8xf32>
    %8 = tpu.matmul %6, %7, %cst_7 {dimension_numbers = #tpu.dot_dimension_numbers<[1], [0], [0], [1], [0, 0, 1, 1], [], []>} : vector<2x32xf32>, vector<32x8xf32>, vector<2x8xf32> -> vector<2x8xf32>
    %c0_8 = arith.constant 0 : index
    %c0_9 = arith.constant 0 : index
    %9 = vector.load %arg4[%c0_8, %c0_9] : memref<1x8xf32, #tpu.memory_space<vmem>>, vector<1x8xf32>
    %10 = vector.broadcast %9 : vector<1x8xf32> to vector<2x8xf32>
    %11 = arith.addf %8, %10 : vector<2x8xf32>
    %12 = math.tanh %11 : vector<2x8xf32>
    %c0_10 = arith.constant 0 : index
    %c0_11 = arith.constant 0 : index
    %13 = vector.load %arg5[%c0_10, %c0_11] : memref<2x8xf32, #tpu.memory_space<vmem>>, vector<2x8xf32>
    tpu.vector_store %arg5[%c0_10, %c0_11], %12 {strides = array<i32>} : memref<2x8xf32, #tpu.memory_space<vmem>>, vector<2x8xf32>,
    return
  }
}

</mosaic_0001>

<llo_original>
// kernel: tpu_custom_call.1
$region0: #{tpu_custom_call.1}
  #allocation0 [shape = 'u32[]', space=smem, size = 0x4, offset = 0x4, fixed_abs, tag = 'smem constant byte address 0x4 - core index']
  #allocation1 [shape = 'u32[144,128]{1,0:T(1,128)}', space=vmem, size = 0x12000, scoped, tag = 'internal scratch']
  %s0 = inlined_call_operand.vmem [shape: f32[2,16], index: 0, kind: input, shape index: {}]
  %s1 = inlined_call_operand.vmem [shape: f32[16,32], index: 1, kind: input, shape index: {}]
  %s2 = inlined_call_operand.vmem [shape: f32[1,32], index: 2, kind: input, shape index: {}]
  %s3 = inlined_call_operand.vmem [shape: f32[32,8], index: 3, kind: input, shape index: {}]
  %s4 = inlined_call_operand.vmem [shape: f32[1,8], index: 4, kind: input, shape index: {}]
  %s5 = inlined_call_operand.hbm [shape: f32[2,8], index: 5, kind: output, shape index: {}]
  %s6 = sld [smem:[#allocation0]]
  $region30: #{tpu_custom_call.1} parent=0
    _
  %s8 = ssub.s32 1, %s6
  %s9 = scalar_select 0, %s8, %s6
  $region1: #{tpu_custom_call.1} parent=0
    #allocation2 [shape = 'u8[1024]{0}', space=vmem, size = 0x400, scoped, tag = 'output window, operand 0, single buffered']
    #allocation3 [shape = 's32[1]{0}', space=sflag, size = 0x4, scoped, tag = 'scoped memory for tpu_custom_call.1']
    %10 = vsyncpa [#allocation3], 0
    // Predicated region
    $region2: #{tpu_custom_call.1} parent=1 // pred_check
      _
    $region3: #{tpu_custom_call.1} parent=1 // pred_check_branch
      %12 = sbr.rel (0) target = $region5
    $region4: #{tpu_custom_call.1} parent=1 // pred_region
      _
    $region5: #{tpu_custom_call.1} parent=1 // pred_fallthru
      _
    // Predicated region
    $region6: #{tpu_custom_call.1} parent=1 // pred_check
      _
    $region7: #{tpu_custom_call.1} parent=1 // pred_check_branch
      %14 = sbr.rel (0) target = $region9
    $region8: #{tpu_custom_call.1} parent=1 // pred_region
      _
    $region9: #{tpu_custom_call.1} parent=1 // pred_fallthru
      _
    // Predicated region
    $region10: #{tpu_custom_call.1} parent=1 // pred_check
      _
    $region11: #{tpu_custom_call.1} parent=1 // pred_check_branch
      %16 = sbr.rel (0) target = $region13
    $region12: #{tpu_custom_call.1} parent=1 // pred_region
      _
    $region13: #{tpu_custom_call.1} parent=1 // pred_fallthru
      _
    // Predicated region
    $region14: #{tpu_custom_call.1} parent=1 // pred_check
      _
    $region15: #{tpu_custom_call.1} parent=1 // pred_check_branch
      %18 = sbr.rel (0) target = $region17
    $region16: #{tpu_custom_call.1} parent=1 // pred_region
      _
    $region17: #{tpu_custom_call.1} parent=1 // pred_fallthru
      _
    // Predicated region
    $region18: #{tpu_custom_call.1} parent=1 // pred_check
      _
    $region19: #{tpu_custom_call.1} parent=1 // pred_check_branch
      %20 = sbr.rel (0) target = $region21
    $region20: #{tpu_custom_call.1} parent=1 // pred_region
      _
    $region21: #{tpu_custom_call.1} parent=1 // pred_fallthru
      _
    %v21 = vld [vmem:[%s0] sm:$0x3]
    %v22 = vld [vmem:[%s1] sm:$0xff]
    %v23 = vld [vmem:[%s1 + $0x8] sm:$0xff]
    %v24 = vld [vmem:[%s2] sm:$0x1]
    %v26 = vlaneseq
    %v27 = vshrl.u32 %v26, 7
    %v28 = vsub.s32 0, %v27
    %v29 = vrot.slane %v24, %v28
    %vm31 = vcmask 130048
    %v33 = vsel %vm31, %v21, 0
    %35 = vmatprep.subr.mxu0 0.0
    %36 = vmatpush1.msra.mxu0 %v22
    %37 = vmatprep.subr.mxu0 0.0
    %38 = vmatpush1.msra.mxu0 %v23
    %39 = vmatprep.subr.mxu0 0.0
    %40 = vmatpush1.msra.mxu0 0.0
    %41 = vmatprep.subr.mxu0 0.0
    %42 = vmatpush1.msra.mxu0 0.0
    %43 = vmatprep.subr.mxu0 0.0
    %44 = vmatpush1.msra.mxu0 0.0
    %45 = vmatprep.subr.mxu0 0.0
    %46 = vmatpush1.msra.mxu0 0.0
    %47 = vmatprep.subr.mxu0 0.0
    %48 = vmatpush1.msra.mxu0 0.0
    %49 = vmatprep.subr.mxu0 0.0
    %50 = vmatpush1.msra.mxu0 0.0
    %51 = vmatprep.subr.mxu0 0.0
    %52 = vmatpush1.msra.mxu0 0.0
    %53 = vmatprep.subr.mxu0 0.0
    %54 = vmatpush1.msra.mxu0 0.0
    %55 = vmatprep.subr.mxu0 0.0
    %56 = vmatpush1.msra.mxu0 0.0
    %57 = vmatprep.subr.mxu0 0.0
    %58 = vmatpush1.msra.mxu0 0.0
    %59 = vmatprep.subr.mxu0 0.0
    %60 = vmatpush1.msra.mxu0 0.0
    %61 = vmatprep.subr.mxu0 0.0
    %62 = vmatpush1.msra.mxu0 0.0
    %63 = vmatprep.subr.mxu0 0.0
    %64 = vmatpush1.msra.mxu0 0.0
    %65 = vmatprep.subr.mxu0 0.0
    %66 = vmatpush1.msra.mxu0 0.0
    %67 = vmatprep.subr.mxu0 0.0
    %68 = vmatpush1.msra.mxu0 0.0
    %69 = vmatprep.subr.mxu0 0.0
    %70 = vmatpush1.msra.mxu0 0.0
    %71 = vmatprep.subr.mxu0 0.0
    %72 = vmatpush1.msra.mxu0 0.0
    %73 = vmatprep.subr.mxu0 0.0
    %74 = vmatpush1.msra.mxu0 0.0
    %75 = vmatprep.subr.mxu0 0.0
    %76 = vmatpush1.msra.mxu0 0.0
    %77 = vmatprep.subr.mxu0 0.0
    %78 = vmatpush1.msra.mxu0 0.0
    %79 = vmatprep.subr.mxu0 0.0
    %80 = vmatpush1.msra.mxu0 0.0
    %81 = vmatprep.subr.mxu0 0.0
    %82 = vmatpush1.msra.mxu0 0.0
    %83 = vmatprep.subr.mxu0 0.0
    %84 = vmatpush1.msra.mxu0 0.0
    %85 = vmatprep.subr.mxu0 0.0
    %86 = vmatpush1.msra.mxu0 0.0
    %87 = vmatprep.subr.mxu0 0.0
    %88 = vmatpush1.msra.mxu0 0.0
    %89 = vmatprep.subr.mxu0 0.0
    %90 = vmatpush1.msra.mxu0 0.0
    %91 = vmatprep.subr.mxu0 0.0
    %92 = vmatpush1.msra.mxu0 0.0
    %93 = vmatprep.subr.mxu0 0.0
    %94 = vmatpush1.msra.mxu0 0.0
    %95 = vmatprep.subr.mxu0 0.0
    %96 = vmatpush1.msra.mxu0 0.0
    %97 = vmatprep.subr.mxu0 0.0
    %98 = vmatpush1.msra.mxu0 0.0
    %99 = vmatprep.mubr.f32.mxu0 0.0
    %100 = vmatmul.mubr.f32.gmra.mrb[0].mxu0 %v33
    %v101 = vpop.f32.mrb[0].mxu0
    %v102 = vadd.f32 %v29, %v101
    %v103 = vpop.f32.mrb[0].mxu0
    %104 = vdwg.mxu0
    %v105 = vtanh.pop %v102
    %v106 = vld [vmem:[%s3] sm:$0xff]
    %v107 = vld [vmem:[%s3 + $0x8] sm:$0xff]
    %v108 = vld [vmem:[%s3 + $0x10] sm:$0xff]
    %v109 = vld [vmem:[%s3 + $0x18] sm:$0xff]
    %v110 = vld [vmem:[%s4] sm:$0x1]
    %v112 = vlaneseq
    %v113 = vshrl.u32 %v112, 7
    %v114 = vsub.s32 0, %v113
    %v115 = vrot.slane %v110, %v114
    %vm117 = vcmask 261120
    %v119 = vsel %vm117, %v105, 0
    %121 = vmatprep.subr.mxu0 0.0
    %122 = vmatpush1.msra.mxu0 %v106
    %123 = vmatprep.subr.mxu0 0.0
    %124 = vmatpush1.msra.mxu0 %v107
    %125 = vmatprep.subr.mxu0 0.0
    %126 = vmatpush1.msra.mxu0 %v108
    %127 = vmatprep.subr.mxu0 0.0
    %128 = vmatpush1.msra.mxu0 %v109
    %129 = vmatprep.subr.mxu0 0.0
    %130 = vmatpush1.msra.mxu0 0.0
    %131 = vmatprep.subr.mxu0 0.0
    %132 = vmatpush1.msra.mxu0 0.0
    %133 = vmatprep.subr.mxu0 0.0
    %134 = vmatpush1.msra.mxu0 0.0
    %135 = vmatprep.subr.mxu0 0.0
    %136 = vmatpush1.msra.mxu0 0.0
    %137 = vmatprep.subr.mxu0 0.0
    %138 = vmatpush1.msra.mxu0 0.0
    %139 = vmatprep.subr.mxu0 0.0
    %140 = vmatpush1.msra.mxu0 0.0
    %141 = vmatprep.subr.mxu0 0.0
    %142 = vmatpush1.msra.mxu0 0.0
    %143 = vmatprep.subr.mxu0 0.0
    %144 = vmatpush1.msra.mxu0 0.0
    %145 = vmatprep.subr.mxu0 0.0
    %146 = vmatpush1.msra.mxu0 0.0
    %147 = vmatprep.subr.mxu0 0.0
    %148 = vmatpush1.msra.mxu0 0.0
    %149 = vmatprep.subr.mxu0 0.0
    %150 = vmatpush1.msra.mxu0 0.0
    %151 = vmatprep.subr.mxu0 0.0
    %152 = vmatpush1.msra.mxu0 0.0
    %153 = vmatprep.subr.mxu0 0.0
    %154 = vmatpush1.msra.mxu0 0.0
    %155 = vmatprep.subr.mxu0 0.0
    %156 = vmatpush1.msra.mxu0 0.0
    %157 = vmatprep.subr.mxu0 0.0
    %158 = vmatpush1.msra.mxu0 0.0
    %159 = vmatprep.subr.mxu0 0.0
    %160 = vmatpush1.msra.mxu0 0.0
    %161 = vmatprep.subr.mxu0 0.0
    %162 = vmatpush1.msra.mxu0 0.0
    %163 = vmatprep.subr.mxu0 0.0
    %164 = vmatpush1.msra.mxu0 0.0
    %165 = vmatprep.subr.mxu0 0.0
    %166 = vmatpush1.msra.mxu0 0.0
    %167 = vmatprep.subr.mxu0 0.0
    %168 = vmatpush1.msra.mxu0 0.0
    %169 = vmatprep.subr.mxu0 0.0
    %170 = vmatpush1.msra.mxu0 0.0
    %171 = vmatprep.subr.mxu0 0.0
    %172 = vmatpush1.msra.mxu0 0.0
    %173 = vmatprep.subr.mxu0 0.0
    %174 = vmatpush1.msra.mxu0 0.0
    %175 = vmatprep.subr.mxu0 0.0
    %176 = vmatpush1.msra.mxu0 0.0
    %177 = vmatprep.subr.mxu0 0.0
    %178 = vmatpush1.msra.mxu0 0.0
    %179 = vmatprep.subr.mxu0 0.0
    %180 = vmatpush1.msra.mxu0 0.0
    %181 = vmatprep.subr.mxu0 0.0
    %182 = vmatpush1.msra.mxu0 0.0
    %183 = vmatprep.subr.mxu0 0.0
    %184 = vmatpush1.msra.mxu0 0.0
    %185 = vmatprep.mubr.f32.mxu0 0.0
    %186 = vmatmul.mubr.f32.gmra.mrb[0].mxu0 %v119
    %v187 = vpop.f32.mrb[0].mxu0
    %v188 = vadd.f32 %v115, %v187
    %v189 = vpop.f32.mrb[0].mxu0
    %190 = vdwg.mxu0
    %v191 = vtanh.pop %v188
    %vm192 = vcmask 58368
    %193 = vst.msk [vmem:[#allocation2] sm:$0x3] %vm192, %v191
    // Predicated region
    $region22: #{tpu_custom_call.1} parent=1 // pred_check
      _
    $region23: #{tpu_custom_call.1} parent=1 // pred_check_branch
      %195 = sbr.rel (0) target = $region25
    $region24: #{tpu_custom_call.1} parent=1 // pred_region
      %s197 = ssub.s32 32, 32
      %198 = vsyncadd [#allocation3], %s197
      %s200 = sshll.u32 [#allocation2], 4
      %s201 = int_to_ptr.vmem [resolvable:$true] %s200
      %203 = dma.vmem_to_hbm [thread:$0]  %s201, 32, %s5, [#allocation3]
    $region25: #{tpu_custom_call.1} parent=1 // pred_fallthru
      _
    // Predicated region
    $region26: #{tpu_custom_call.1} parent=1 // pred_check
      _
    $region27: #{tpu_custom_call.1} parent=1 // pred_check_branch
      %205 = sbr.rel (0) target = $region29
    $region28: #{tpu_custom_call.1} parent=1 // pred_region
      %206 = dma.done [#allocation3], 32
    $region29: #{tpu_custom_call.1} parent=1 // pred_fallthru
      _
    %207 = vsyncpa [#allocation3], 1

</llo_original>
